<compile_context>
chip_gen: v6e
topology: v6e:2x2x1
jax: 0.10.0
libtpu: 0.0.40
codegen_flags: <defaults>
</compile_context>

<pallas_src>
import functools
import numpy as np
import jax
import jax.numpy as jnp
from jax.experimental import pallas as pl
from jax.experimental.pallas import tpu as pltpu


# ---------------------------------------------------------------------------
# Deterministic parameter init (numpy port of the PyTorch module's __init__)
# ---------------------------------------------------------------------------
def window_fn(window_type, N):
    def hanning(n):
        return 0.5 * (1 - np.cos(2 * np.pi * (n - 1) / (N - 1)))

    def hamming(n):
        return 0.54 - 0.46 * np.cos(2 * np.pi * (n - 1) / (N - 1))

    if window_type == 'hanning':
        return np.asarray([hanning(n) for n in range(N)])
    else:
        return np.asarray([hamming(n) for n in range(N)])


class Gabor(object):
    def __init__(self, nfilters=40, min_freq=0, max_freq=8000, fs=16000,
                 wlen=25, wstride=10, nfft=1024, normalize_energy=False):
        self.nfilters = nfilters
        self.min_freq = min_freq
        self.max_freq = max_freq
        self.fs = fs
        self.wlen = wlen
        self.wstride = wstride
        self.nfft = nfft
        self.normalize_energy = normalize_energy
        self._build_mels()
        self._build_gabors()

    def _hz2mel(self, f):
        return 2595 * np.log10(1 + f / 700)

    def _mel2hz(self, m):
        return 700 * (np.power(10, m / 2595) - 1)

    def _gabor_wavelet(self, eta, sigma):
        T = self.wlen * self.fs / 1000

        def gabor_function(t):
            return (1 / (np.sqrt(2 * np.pi) * sigma)
                    * np.exp(1j * eta * t) * np.exp(-t ** 2 / (2 * sigma ** 2)))

        return np.asarray([gabor_function(t) for t in np.arange(-T / 2, T / 2 + 1)])

    def _gabor_params_from_mel(self, mel_filter):
        coeff = np.sqrt(2 * np.log(2)) * self.nfft
        mel_filter = np.sqrt(mel_filter)
        center_frequency = np.argmax(mel_filter)
        peak = mel_filter[center_frequency]
        half_magnitude = peak / 2.0
        spread = np.where(mel_filter >= half_magnitude)[0]
        width = max(spread[-1] - spread[0], 1)
        return (center_frequency * 2 * np.pi / self.nfft, coeff / (np.pi * width))

    def _melfilter_energy(self, mel_filter):
        height = max(mel_filter)
        hz_spread = (len(np.where(mel_filter > 0)[0]) + 2) * 2 * np.pi / self.nfft
        return 0.5 * height * hz_spread

    def _build_mels(self):
        self.melfilters = [np.zeros(self.nfft // 2 + 1) for _ in range(self.nfilters)]
        dfreq = self.fs / self.nfft
        melmax = self._hz2mel(self.max_freq)
        melmin = self._hz2mel(self.min_freq)
        dmelbw = (melmax - melmin) / (self.nfilters + 1)
        filt_edge = self._mel2hz(melmin + dmelbw * np.arange(self.nfilters + 2, dtype='d'))
        self.filt_edge = filt_edge
        for filter_idx in range(0, self.nfilters):
            leftfr = min(round(filt_edge[filter_idx] / dfreq), self.nfft // 2)
            centerfr = min(round(filt_edge[filter_idx + 1] / dfreq), self.nfft // 2)
            rightfr = min(round(filt_edge[filter_idx + 2] / dfreq), self.nfft // 2)
            height = 1
            if centerfr != leftfr:
                leftslope = height / (centerfr - leftfr)
            else:
                leftslope = 0
            freq = leftfr + 1
            while freq < centerfr:
                self.melfilters[filter_idx][int(freq)] = (freq - leftfr) * leftslope
                freq += 1
            if freq == centerfr:
                self.melfilters[filter_idx][int(freq)] = height
                freq += 1
            if centerfr != rightfr:
                rightslope = height / (centerfr - rightfr)
            while freq < rightfr:
                self.melfilters[filter_idx][int(freq)] = (freq - rightfr) * rightslope
                freq += 1
            if self.normalize_energy:
                energy = self._melfilter_energy(self.melfilters[filter_idx])
                self.melfilters[filter_idx] /= energy

    def _build_gabors(self):
        self.gaborfilters = []
        self.sigmas = []
        self.center_frequencies = []
        for mel_filter in self.melfilters:
            center_frequency, sigma = self._gabor_params_from_mel(mel_filter)
            self.sigmas.append(sigma)
            self.center_frequencies.append(center_frequency)
            gabor_filter = self._gabor_wavelet(center_frequency, sigma)
            gabor_filter = gabor_filter * np.sqrt(
                self._melfilter_energy(mel_filter) * 2 * np.sqrt(np.pi) * sigma)
            self.gaborfilters.append(gabor_filter)


def make_tdfbanks_params(nfilters, samplerate, wlen, wstride, n_fft, f_min, f_max):
    window_size = samplerate * wlen // 1000 + 1
    window_stride = samplerate * wstride // 1000
    gab = Gabor(nfilters, f_min, f_max, samplerate, wlen, wstride, n_fft, False)
    w_re = np.stack([np.real(g) for g in gab.gaborfilters]).astype(np.float32)   # (F, W)
    w_im = np.stack([np.imag(g) for g in gab.gaborfilters]).astype(np.float32)   # (F, W)
    lp_win = window_fn('hanning', window_size).astype(np.float32)                # (W,)
    return w_re, w_im, lp_win, window_size, window_stride


# ---------------------------------------------------------------------------
# Pallas kernel
# ---------------------------------------------------------------------------
def _tdfbanks_kernel(xw_ref, wg_ref, lp_ref, o_ref, acc_ref, *, nfilters):
    t = pl.program_id(1)

    @pl.when(t == 0)
    def _init():
        acc_ref[...] = jnp.zeros_like(acc_ref)

    # Fused complex "conv": one MXU matmul produces real (rows [0,F)) and
    # imaginary (rows [F,2F)) responses together, lane-dense along the tile.
    #   (2F, Wp) @ (Wp, tT) -> (2F, tT), f32 accumulation from bf16 operands.
    conv = jax.lax.dot_general(
        wg_ref[...], xw_ref[0],
        dimension_numbers=(((1,), (0,)), ((), ())),
        preferred_element_type=jnp.float32)                       # (2F, tT)
    sq = conv * conv                                              # (2F, tT)

    # Lowpass (identical hanning window for every filter, mode='fixed') as a
    # second matmul against the banded window matrix; accumulate over T tiles.
    #   (2F, tT) @ (tT, n_frames) -> (2F, n_frames)
    acc_ref[...] += jax.lax.dot_general(
        sq, lp_ref[...],
        dimension_numbers=(((1,), (0,)), ((), ())),
        preferred_element_type=jnp.float32)

    @pl.when(t == pl.num_programs(1) - 1)
    def _finalize():
        acc = acc_ref[...]                                        # (2F, n_frames)
        y = acc[:nfilters, :] + acc[nfilters:, :]                 # re^2 + im^2 lowpassed
        y = jnp.log(jnp.abs(y) + 1e-12)                           # compression='log'
        y = jnp.where(jnp.isfinite(y), y, 0.0)                    # nan_to_num(0,0,0)
        o_ref[0] = y


def tdfbanks_forward(x, w_re, w_im, lp_win, window_size, window_stride, *, t_tile=512):
    B, T = x.shape
    F = w_re.shape[0]
    W = int(window_size)
    S = int(window_stride)
    pad = (W - 1) // 2
    n_frames = (T - W) // S + 1

    Wp = ((W + 127) // 128) * 128                   # taps padded to full lane tiles
    T_pad = ((T + t_tile - 1) // t_tile) * t_tile   # T padded to a whole number of tiles
    num_t = T_pad // t_tile

    # Fused, lane-dense complex-conv weights: rows [0,F) real, [F,2F) imag; bf16.
    wg = np.zeros((2 * F, Wp), np.float32)
    wg[:F, :W] = w_re
    wg[F:, :W] = w_im
    wg = jnp.asarray(wg, dtype=jnp.bfloat16)

    # Banded lowpass matrix (transposed): lpT[u, j] = hanning[u - j*S] on the band.
    # Columns for padded positions u >= T are zero, so T-padding contributes nothing.
    lpT = np.zeros((T_pad, n_frames), np.float32)
    for j in range(n_frames):
        lpT[j * S: j * S + W, j] = lp_win
    lpT = jnp.asarray(lpT)

    # im2col slab (transposed, bf16): xwT[b, k, u] = x_padded[b, u + k].
    # TODO(synk): construct the sliding windows in-kernel from the raw padded
    # waveform to remove this ~Wp-fold HBM expansion entirely.
    total_len = T_pad + Wp - 1
    x_pad = jnp.pad(x.astype(jnp.float32),
                    ((0, 0), (pad, total_len - T - pad))).astype(jnp.bfloat16)
    idx = (np.arange(Wp, dtype=np.int32)[:, None]
           + np.arange(T_pad, dtype=np.int32)[None, :])            # (Wp, T_pad)
    xwT = x_pad[:, idx]                                             # (B, Wp, T_pad)

    kernel = functools.partial(_tdfbanks_kernel, nfilters=F)
    out = pl.pallas_call(
        kernel,
        out_shape=jax.ShapeDtypeStruct((B, F, n_frames), jnp.float32),
        grid_spec=pltpu.PrefetchScalarGridSpec(
            num_scalar_prefetch=0,
            grid=(B, num_t),                         # reduction (T tiles) last
            in_specs=[
                pl.BlockSpec((1, Wp, t_tile), lambda b, t: (b, 0, t)),   # waveform windows
                pl.BlockSpec((2 * F, Wp), lambda b, t: (0, 0)),          # gabor weights
                pl.BlockSpec((t_tile, n_frames), lambda b, t: (t, 0)),   # lowpass band
            ],
            out_specs=pl.BlockSpec((1, F, n_frames), lambda b, t: (b, 0, 0)),
            scratch_shapes=[pltpu.VMEM((2 * F, n_frames), jnp.float32)],
        ),
        compiler_params=pltpu.CompilerParams(
            dimension_semantics=("parallel", "arbitrary")),
    )(xwT, wg, lpT)
    return out                                        # (B, nfilters, n_frames)


# TODO(synk): preemp / mvn (InstanceNorm1d) branches are disabled by the module
# defaults and are not implemented here.

if __name__ == "__main__":
    B, T = 2, 1600                  # 0.1 s of 16 kHz audio per example
    nfilters = 8
    fs, wlen, wstride = 16000, 25, 10
    n_fft, f_min, f_max = 1024, 0, 8000

    w_re, w_im, lp_win, W, S = make_tdfbanks_params(
        nfilters, fs, wlen, wstride, n_fft, f_min, f_max)

    key = jax.random.PRNGKey(0)
    x = jax.random.normal(key, (B, T), dtype=jnp.float32)

    y = tdfbanks_forward(x, w_re, w_im, lp_win, W, S)
    y = jax.block_until_ready(y)

    n_frames = (T - W) // S + 1
    assert y.shape == (B, nfilters, n_frames), y.shape
    assert bool(jnp.all(jnp.isfinite(y)))
    print("KERNEL_OK")
</pallas_src>

<mosaic_0001>
module attributes {stable_mosaic.version = 11 : i64} {
  func.func @_tdfbanks_kernel(%arg0: i32, %arg1: i32, %arg2: memref<1x512x512xbf16, #tpu.memory_space<vmem>>, %arg3: memref<16x512xbf16, #tpu.memory_space<vmem>>, %arg4: memref<512x8xf32, #tpu.memory_space<vmem>>, %arg5: memref<1x8x8xf32, #tpu.memory_space<vmem>>, %arg6: memref<16x8xf32, #tpu.memory_space<vmem>>) attributes {dimension_semantics = [#tpu.dimension_semantics<parallel>, #tpu.dimension_semantics<arbitrary>], iteration_bounds = array<i64: 2, 4>, scalar_prefetch = 0 : i64, scratch_operands = 1 : i64, tpu.core_type = #tpu.core_type<tc>, window_params = [{transform_indices = @transform_0, window_bounds = array<i64: 1, 512, 512>}, {pipeline_mode = #tpu.pipeline_mode<synchronous>, transform_indices = @transform_1, window_bounds = array<i64: 16, 512>}, {transform_indices = @transform_2, window_bounds = array<i64: 512, 8>}, {transform_indices = @transform_3, window_bounds = array<i64: 1, 8, 8>}]} {
    %c0_i32 = arith.constant 0 : i32
    %0 = arith.cmpi eq, %arg1, %c0_i32 : i32
    %1 = arith.extui %0 : i1 to i32
    %c0_i32_0 = arith.constant 0 : i32
    %2 = arith.cmpi ne, %1, %c0_i32_0 : i32
    scf.if %2 {
      %cst_13 = arith.constant 0.000000e+00 : f32
      %16 = vector.broadcast %cst_13 : f32 to vector<16x8xf32>
      %c0_14 = arith.constant 0 : index
      %c0_15 = arith.constant 0 : index
      %17 = vector.load %arg6[%c0_14, %c0_15] : memref<16x8xf32, #tpu.memory_space<vmem>>, vector<16x8xf32>
      tpu.vector_store %arg6[%c0_14, %c0_15], %16 {strides = array<i32>} : memref<16x8xf32, #tpu.memory_space<vmem>>, vector<16x8xf32>,
    } else {
    }
    %c0 = arith.constant 0 : index
    %c0_1 = arith.constant 0 : index
    %3 = vector.load %arg3[%c0, %c0_1] : memref<16x512xbf16, #tpu.memory_space<vmem>>, vector<16x512xbf16>
    %c0_2 = arith.constant 0 : index
    %c0_3 = arith.constant 0 : index
    %c0_4 = arith.constant 0 : index
    %4 = vector.load %arg2[%c0_2, %c0_3, %c0_4] : memref<1x512x512xbf16, #tpu.memory_space<vmem>>, vector<1x512x512xbf16>
    %5 = vector.shape_cast %4 : vector<1x512x512xbf16> to vector<512x512xbf16>
    %cst = arith.constant dense<0.000000e+00> : vector<16x512xf32>
    %6 = tpu.matmul %3, %5, %cst {dimension_numbers = #tpu.dot_dimension_numbers<[1], [0], [0], [1], [0, 0, 1, 1], [], []>} : vector<16x512xbf16>, vector<512x512xbf16>, vector<16x512xf32> -> vector<16x512xf32>
    %7 = arith.mulf %6, %6 : vector<16x512xf32>
    %c0_5 = arith.constant 0 : index
    %c0_6 = arith.constant 0 : index
    %8 = vector.load %arg6[%c0_5, %c0_6] : memref<16x8xf32, #tpu.memory_space<vmem>>, vector<16x8xf32>
    %c0_7 = arith.constant 0 : index
    %c0_8 = arith.constant 0 : index
    %9 = vector.load %arg4[%c0_7, %c0_8] : memref<512x8xf32, #tpu.memory_space<vmem>>, vector<512x8xf32>
    %cst_9 = arith.constant dense<0.000000e+00> : vector<16x8xf32>
    %10 = tpu.matmul %7, %9, %cst_9 {dimension_numbers = #tpu.dot_dimension_numbers<[1], [0], [0], [1], [0, 0, 1, 1], [], []>} : vector<16x512xf32>, vector<512x8xf32>, vector<16x8xf32> -> vector<16x8xf32>
    %11 = arith.addf %8, %10 : vector<16x8xf32>
    %c0_10 = arith.constant 0 : index
    %c0_11 = arith.constant 0 : index
    %12 = vector.load %arg6[%c0_10, %c0_11] : memref<16x8xf32, #tpu.memory_space<vmem>>, vector<16x8xf32>
    tpu.vector_store %arg6[%c0_10, %c0_11], %11 {strides = array<i32>} : memref<16x8xf32, #tpu.memory_space<vmem>>, vector<16x8xf32>,
    %c3_i32 = arith.constant 3 : i32
    %13 = arith.cmpi eq, %arg1, %c3_i32 : i32
    %14 = arith.extui %13 : i1 to i32
    %c0_i32_12 = arith.constant 0 : i32
    %15 = arith.cmpi ne, %14, %c0_i32_12 : i32
    scf.if %15 {
      %c0_13 = arith.constant 0 : index
      %c0_14 = arith.constant 0 : index
      %16 = vector.load %arg6[%c0_13, %c0_14] : memref<16x8xf32, #tpu.memory_space<vmem>>, vector<16x8xf32>
      %17 = vector.extract_strided_slice %16 {offsets = [0, 0], sizes = [8, 8], strides = [1, 1]} : vector<16x8xf32> to vector<8x8xf32>
      %18 = vector.extract_strided_slice %16 {offsets = [8, 0], sizes = [8, 8], strides = [1, 1]} : vector<16x8xf32> to vector<8x8xf32>
      %19 = arith.addf %17, %18 : vector<8x8xf32>
      %20 = math.absf %19 : vector<8x8xf32>
      %cst_15 = arith.constant 9.99999996E-13 : f32
      %21 = vector.broadcast %cst_15 : f32 to vector<8x8xf32>
      %22 = arith.addf %20, %21 : vector<8x8xf32>
      %23 = math.log %22 : vector<8x8xf32>
      %24 = tpu.weird %23 : vector<8x8xf32> -> vector<8x8xi1>
      %cst_16 = arith.constant dense<true> : vector<8x8xi1>
      %25 = arith.xori %24, %cst_16 : vector<8x8xi1>
      %cst_17 = arith.constant 0.000000e+00 : f32
      %26 = vector.broadcast %cst_17 : f32 to vector<8x8xf32>
      %27 = arith.select %25, %23, %26 : vector<8x8xi1>, vector<8x8xf32>
      %c0_18 = arith.constant 0 : index
      %c0_19 = arith.constant 0 : index
      %c0_20 = arith.constant 0 : index
      %28 = vector.load %arg5[%c0_18, %c0_19, %c0_20] : memref<1x8x8xf32, #tpu.memory_space<vmem>>, vector<1x8x8xf32>
      %29 = vector.shape_cast %28 : vector<1x8x8xf32> to vector<8x8xf32>
      %30 = vector.shape_cast %27 : vector<8x8xf32> to vector<1x8x8xf32>
      tpu.vector_store %arg5[%c0_18, %c0_19, %c0_20], %30 {strides = array<i32>} : memref<1x8x8xf32, #tpu.memory_space<vmem>>, vector<1x8x8xf32>,
    } else {
    }
    return
  }
  func.func @transform_0(%arg0: i32, %arg1: i32) -> (i32, i32, i32) {
    %c0_i32 = arith.constant 0 : i32
    %c0_i32_0 = arith.constant 0 : i32
    return %arg0, %c0_i32, %arg1 : i32, i32, i32
  }
  func.func @transform_1(%arg0: i32, %arg1: i32) -> (i32, i32) {
    %c0_i32 = arith.constant 0 : i32
    %c0_i32_0 = arith.constant 0 : i32
    %c0_i32_1 = arith.constant 0 : i32
    return %c0_i32, %c0_i32_0 : i32, i32
  }
  func.func @transform_2(%arg0: i32, %arg1: i32) -> (i32, i32) {
    %c0_i32 = arith.constant 0 : i32
    %c0_i32_0 = arith.constant 0 : i32
    return %arg1, %c0_i32 : i32, i32
  }
  func.func @transform_3(%arg0: i32, %arg1: i32) -> (i32, i32, i32) {
    %c0_i32 = arith.constant 0 : i32
    %c0_i32_0 = arith.constant 0 : i32
    %c0_i32_1 = arith.constant 0 : i32
    return %arg0, %c0_i32, %c0_i32_0 : i32, i32, i32
  }
}

</mosaic_0001>

<llo_original>
// kernel: tpu_custom_call.1
$region0: #{tpu_custom_call.1}
  #allocation0 [shape = 'u32[]', space=smem, size = 0x4, offset = 0x4, fixed_abs, tag = 'smem constant byte address 0x4 - core index']
  #allocation1 [shape = 'u32[144,128]{1,0:T(1,128)}', space=vmem, size = 0x12000, scoped, tag = 'internal scratch']
  #allocation2 [shape = 'f32[16,8]{1,0:T(8,128)}', space=vmem, size = 0x2000, scoped, tag = 'scratch operand']
  %s0 = inlined_call_operand.hbm [shape: bf16[2,512,2048], index: 0, kind: input, shape index: {}]
  %s1 = inlined_call_operand.hbm [shape: bf16[16,512], index: 1, kind: input, shape index: {}]
  %s2 = inlined_call_operand.vmem [shape: f32[2048,8], index: 2, kind: input, shape index: {}]
  %s3 = inlined_call_operand.hbm [shape: f32[2,8,8], index: 3, kind: output, shape index: {}]
  %s4 = sld [smem:[#allocation0]]
  $region61: #{tpu_custom_call.1} parent=0
    _
  %s6 = ssub.s32 1, %s4
  %s7 = scalar_select 0, %s6, %s4
  $region1: #{tpu_custom_call.1} parent=0
    #allocation3 [shape = 'u8[1048576]{0}', space=vmem, size = 0x100000, scoped, tag = 'input window, operand 0']
    #allocation4 [shape = 's32[2]{0}', space=sflag, size = 0x8, scoped, tag = 'scoped memory for tpu_custom_call.1']
    #allocation5 [shape = 's32[2]{0}', space=sflag, size = 0x8, scoped, tag = 'scoped memory for tpu_custom_call.1']
    #allocation6 [shape = 'u8[16384]{0}', space=vmem, size = 0x4000, scoped, tag = 'input window, operand 1, single buffered']
    #allocation7 [shape = 's32[1]{0}', space=sflag, size = 0x4, scoped, tag = 'scoped memory for tpu_custom_call.1']
    #allocation8 [shape = 'u8[8192]{0}', space=vmem, size = 0x2000, scoped, tag = 'output window, operand 0']
    %8 = vsyncpa [#allocation4], 0
    %s9 = scalar_lea.sflag [#allocation4], 1
    %10 = vsyncpa %s9, 0
    %11 = vsyncpa [#allocation7], 0
    %12 = vsyncpa [#allocation5], 0
    %s13 = scalar_lea.sflag [#allocation5], 1
    %14 = vsyncpa %s13, 0
    loop: start=0, step=1, limit=10
    $region2: #{tpu_custom_call.1} parent=1 // loop_pre_header
      _
    $region3: #{tpu_custom_call.1} parent=1 // loop_header
      %s16 = sphi 0, %s20
      %p17 = scmp.ge.s32.totalorder %s16, 10
      %s23 = sphi 0, %s35
      %s24 = sphi 0, %s31
      %s25 = sphi 0, %s23
      %s26 = sphi 0, %s24
      %s27 = sphi 0, %s25
      %s28 = sphi 0, %s26
      %s40 = sphi 0, %s42
      %s43 = sphi 0, %s40
      %s44 = sphi 0, %s43
      %s60 = sphi 0, %s44
      %s64 = sphi 0, %s64
      %s66 = sphi 0, %s64
      %s67 = sphi 0, %s66
      %s81 = sphi 0, %s67
      %s87 = sphi 0, %s89
      %s90 = sphi 0, %s87
      %s91 = sphi 0, %s90
      %s107 = sphi 0, %s91
      %s113 = sphi 0, %s115
      %s116 = sphi 0, %s113
      %s117 = sphi 0, %s116
      %s133 = sphi 0, %s117
    $region4: #{tpu_custom_call.1} parent=1 // loop_header_branch
      %19 = sbr.rel (%p17) target = $region8
    $region5: #{tpu_custom_call.1} parent=1 // loop_body
      %s21 = ssub.s32 %s16, 1
      %s22 = ssub.s32 %s16, 2
      %s29 = sadd.s32 1, %s24
      %p30 = scmp.ge.s32.totalorder %s29, 4
      %s31 = scalar_select %p30, 0, %s29
      %s32 = sadd.s32 1, %s23
      %s33 = scalar_select %p30, %s32, %s23
      %p34 = scmp.ge.s32.totalorder %s33, 2
      %s35 = scalar_select %p34, 0, %s33
      %s36 = ssub.s32 %s23, %s35
      %s37 = ssub.s32 %s24, %s31
      %s38 = sor.u32 %s36, %s37
      %p39 = scmp.eq.s32.totalorder %s38, 0
      %s41 = sadd.s32 %s40, 1
      %s42 = scalar_select %p39, %s40, %s41
      %p45 = pneg %p39
      %p46 = scmp.eq.s32.totalorder %s16, 7
      %p47 = por %p45, %p46
      %p48 = scmp.ne.s32.totalorder %s40, %s43
      %p49 = scmp.eq.s32.totalorder %s16, 0
      %p50 = por %p48, %p49
      %p51 = scmp.ne.s32.totalorder %s40, %s43
      %p52 = scmp.eq.s32.totalorder %s21, 7
      %p53 = por %p51, %p52
      %p54 = scmp.ne.s32.totalorder %s43, %s44
      %p55 = scmp.eq.s32.totalorder %s21, 0
      %p56 = por %p54, %p55
      %p57 = scmp.ne.s32.totalorder %s43, %s44
      %p58 = scmp.eq.s32.totalorder %s22, 7
      %p59 = por %p57, %p58
      %p61 = scmp.ne.s32.totalorder %s44, %s60
      %p62 = scmp.eq.s32.totalorder %s22, 0
      %p63 = por %p61, %p62
      %s65 = sadd.s32 %s64, 1
      %p68 = scmp.eq.s32.totalorder %s16, 7
      %p69 = scmp.ne.s32.totalorder %s64, %s66
      %p70 = scmp.eq.s32.totalorder %s16, 0
      %p71 = por %p69, %p70
      %p72 = scmp.ne.s32.totalorder %s64, %s66
      %p73 = scmp.eq.s32.totalorder %s21, 7
      %p74 = por %p72, %p73
      %p75 = scmp.ne.s32.totalorder %s66, %s67
      %p76 = scmp.eq.s32.totalorder %s21, 0
      %p77 = por %p75, %p76
      %p78 = scmp.ne.s32.totalorder %s66, %s67
      %p79 = scmp.eq.s32.totalorder %s22, 7
      %p80 = por %p78, %p79
      %p82 = scmp.ne.s32.totalorder %s67, %s81
      %p83 = scmp.eq.s32.totalorder %s22, 0
      %p84 = por %p82, %p83
      %s85 = ssub.s32 %s24, %s31
      %p86 = scmp.eq.s32.totalorder %s85, 0
      %s88 = sadd.s32 %s87, 1
      %s89 = scalar_select %p86, %s87, %s88
      %p92 = pneg %p86
      %p93 = scmp.eq.s32.totalorder %s16, 7
      %p94 = por %p92, %p93
      %p95 = scmp.ne.s32.totalorder %s87, %s90
      %p96 = scmp.eq.s32.totalorder %s16, 0
      %p97 = por %p95, %p96
      %p98 = scmp.ne.s32.totalorder %s87, %s90
      %p99 = scmp.eq.s32.totalorder %s21, 7
      %p100 = por %p98, %p99
      %p101 = scmp.ne.s32.totalorder %s90, %s91
      %p102 = scmp.eq.s32.totalorder %s21, 0
      %p103 = por %p101, %p102
      %p104 = scmp.ne.s32.totalorder %s90, %s91
      %p105 = scmp.eq.s32.totalorder %s22, 7
      %p106 = por %p104, %p105
      %p108 = scmp.ne.s32.totalorder %s91, %s107
      %p109 = scmp.eq.s32.totalorder %s22, 0
      %p110 = por %p108, %p109
      %s111 = ssub.s32 %s23, %s35
      %p112 = scmp.eq.s32.totalorder %s111, 0
      %s114 = sadd.s32 %s113, 1
      %s115 = scalar_select %p112, %s113, %s114
      %p118 = pneg %p112
      %p119 = scmp.eq.s32.totalorder %s16, 7
      %p120 = por %p118, %p119
      %p121 = scmp.ne.s32.totalorder %s113, %s116
      %p122 = scmp.eq.s32.totalorder %s16, 0
      %p123 = por %p121, %p122
      %p124 = scmp.ne.s32.totalorder %s113, %s116
      %p125 = scmp.eq.s32.totalorder %s21, 7
      %p126 = por %p124, %p125
      %p127 = scmp.ne.s32.totalorder %s116, %s117
      %p128 = scmp.eq.s32.totalorder %s21, 0
      %p129 = por %p127, %p128
      %p130 = scmp.ne.s32.totalorder %s116, %s117
      %p131 = scmp.eq.s32.totalorder %s22, 7
      %p132 = por %p130, %p131
      %p134 = scmp.ne.s32.totalorder %s117, %s133
      %p135 = scmp.eq.s32.totalorder %s22, 0
      %p136 = por %p134, %p135
      %p137 = scmp.le.s32.totalorder 1, %s16
      %p138 = scmp.lt.s32.totalorder %s16, 9
      %p139 = pnand %p137, %p138
      %p140 = pneg %p139
      // Predicated region
      $region9: #{tpu_custom_call.1} parent=5 // pred_check
        _
      $region10: #{tpu_custom_call.1} parent=5 // pred_check_branch
        %142 = sbr.rel (%p139) target = $region12
      $region11: #{tpu_custom_call.1} parent=5 // pred_region
        %s143 = ssub.s32 %s16, 1
        // Predicated region
        $region13: #{tpu_custom_call.1} parent=11 // pred_check
          %p144 = pneg %p77
        $region14: #{tpu_custom_call.1} parent=11 // pred_check_branch
          %146 = sbr.rel (%p144) target = $region16
        $region15: #{tpu_custom_call.1} parent=11 // pred_region
          %s148 = ssub.s32 512, 512
          %149 = vsyncadd [#allocation7], %s148
          %s150 = sshll.u32 [#allocation6], 4
          %s151 = int_to_ptr.vmem [resolvable:$true] %s150
          %156 = dma.hbm_to_vmem [thread:$0]  %s1, 512, %s151, [#allocation7], 256, 256, 16
        $region16: #{tpu_custom_call.1} parent=11 // pred_fallthru
          _
      $region12: #{tpu_custom_call.1} parent=5 // pred_fallthru
        _
      %p157 = scmp.lt.s32.totalorder %s16, 8
      // Predicated region
      $region17: #{tpu_custom_call.1} parent=5 // pred_check
        %p158 = pneg %p157
      $region18: #{tpu_custom_call.1} parent=5 // pred_check_branch
        %160 = sbr.rel (%p158) target = $region20
      $region19: #{tpu_custom_call.1} parent=5 // pred_region
        // Predicated region
        $region21: #{tpu_custom_call.1} parent=19 // pred_check
          %p161 = pneg %p50
        $region22: #{tpu_custom_call.1} parent=19 // pred_check_branch
          %163 = sbr.rel (%p161) target = $region24
        $region23: #{tpu_custom_call.1} parent=19 // pred_region
          %s164 = sand.u32 %s40, 1
          %s165 = scalar_lea.sflag [#allocation4], %s164
          %s166 = sand.u32 %s40, 1
          %s167 = smul.addr %s166, 1024
          %s168 = scalar_lea.vmem [#allocation3], %s167
          %s169 = smul.u32 4, %s24
          %s171 = ssub.s32 16384, 16384
          %172 = vsyncadd %s165, %s171
          %s173 = smul.addr %s23, 1024
          %s174 = sadd.s32 %s169, %s173
          %s175 = smul.addr %s174, 64
          %s176 = scalar_lea.hbm %s0, %s175
          %s177 = sshll.u32 %s168, 4
          %s178 = int_to_ptr.vmem [resolvable:$true] %s177
          %183 = dma.hbm_to_vmem [thread:$0]  %s176, 16384, %s178, %s165, 1024, 256, 16
        $region24: #{tpu_custom_call.1} parent=19 // pred_fallthru
          _
        // Predicated region
        $region25: #{tpu_custom_call.1} parent=19 // pred_check
          %p184 = pneg %p97
        $region26: #{tpu_custom_call.1} parent=19 // pred_check_branch
          %186 = sbr.rel (%p184) target = $region28
        $region27: #{tpu_custom_call.1} parent=19 // pred_region
          %s187 = smul.u32 64, %s24
          %p188 = scmp.lt.s32.totalorder %s187, 255
          %s189 = scalar_select %p188, %s187, 255
          %s190 = smul.addr %s189, 8
          %s191 = scalar_lea.vmem %s2, %s190
          %s192 = smul.u32 64, %s24
        $region28: #{tpu_custom_call.1} parent=19 // pred_fallthru
          _
      $region20: #{tpu_custom_call.1} parent=5 // pred_fallthru
        _
      %p193 = scmp.le.s32.totalorder 1, %s16
      %p194 = scmp.lt.s32.totalorder %s16, 9
      %p195 = pnand %p193, %p194
      %p196 = pneg %p195
      // Predicated region
      $region29: #{tpu_custom_call.1} parent=5 // pred_check
        _
      $region30: #{tpu_custom_call.1} parent=5 // pred_check_branch
        %198 = sbr.rel (%p195) target = $region32
      $region31: #{tpu_custom_call.1} parent=5 // pred_region
        %s199 = ssub.s32 %s16, 1
        %s200 = sand.u32 %s43, 1
        %s201 = scalar_lea.sflag [#allocation4], %s200
        %s202 = sand.u32 %s43, 1
        %s203 = smul.addr %s202, 1024
        %s204 = scalar_lea.vmem [#allocation3], %s203
        // Predicated region
        $region33: #{tpu_custom_call.1} parent=31 // pred_check
          %p205 = pneg %p56
        $region34: #{tpu_custom_call.1} parent=31 // pred_check_branch
          %207 = sbr.rel (%p205) target = $region36
        $region35: #{tpu_custom_call.1} parent=31 // pred_region
          %208 = dma.done %s201, 16384
        $region36: #{tpu_custom_call.1} parent=31 // pred_fallthru
          _
        // Predicated region
        $region37: #{tpu_custom_call.1} parent=31 // pred_check
          %p209 = pneg %p77
        $region38: #{tpu_custom_call.1} parent=31 // pred_check_branch
          %211 = sbr.rel (%p209) target = $region40
        $region39: #{tpu_custom_call.1} parent=31 // pred_region
          %212 = dma.done [#allocation7], 512
        $region40: #{tpu_custom_call.1} parent=31 // pred_fallthru
          _
        %s213 = sand.u32 %s43, 1
        %s214 = scalar_lea.sflag [#allocation4], %s213
        %s215 = sand.u32 %s43, 1
        %s216 = smul.addr %s215, 1024
        %s217 = scalar_lea.vmem [#allocation3], %s216
        %p218 = pneg %p56
        %p219 = pneg %p53
        %p220 = pneg %p77
        %p221 = pneg %p74
        %s222 = smul.u32 64, %s26
        %p223 = scmp.lt.s32.totalorder %s222, 255
        %s224 = scalar_select %p223, %s222, 255
        %s225 = smul.addr %s224, 8
        %s226 = scalar_lea.vmem %s2, %s225
        %p227 = pneg %p103
        %p228 = pneg %p100
        %p229 = pneg %p129
        %p230 = pneg %p126
        %s231 = sand.u32 %s116, 1
        %s232 = scalar_lea.sflag [#allocation5], %s231
        %s233 = sand.u32 %s116, 1
        %s234 = smul.addr %s233, 8
        %s235 = scalar_lea.vmem [#allocation8], %s234
        %s236 = smul.u32 4, %s26
        %s237 = smul.u32 64, %s26
        %p238 = scmp.lt.s32.totalorder %s237, 255
        %s239 = scalar_select %p238, %s237, 255
        %s240 = smul.addr %s239, 8
        %s241 = scalar_lea.vmem %s2, %s240
        %s242 = smul.u32 64, %s26
        %p243 = scmp.eq.s32.totalorder %s26, 0
        // Predicated region
        $region41: #{tpu_custom_call.1} parent=31 // pred_check
          %p244 = pneg %p243
        $region42: #{tpu_custom_call.1} parent=31 // pred_check_branch
          %246 = sbr.rel (%p244) target = $region44
        $region43: #{tpu_custom_call.1} parent=31 // pred_region
          %vm247 = vcmask 64512
          %248 = vst.msk [vmem:[#allocation2] sm:$0xff] %vm247, 0.0
          %249 = vst.msk [vmem:[#allocation2 + $0x8] sm:$0xff] %vm247, 0.0
        $region44: #{tpu_custom_call.1} parent=31 // pred_fallthru
          _
        %v250 = vld [vmem:[#allocation6] sm:$0xff]
        %v251 = vld [vmem:[#allocation6 + $0x8] sm:$0xff]
        %v252 = vld [vmem:[#allocation6 + $0x10] sm:$0xff]
        %v253 = vld [vmem:[#allocation6 + $0x18] sm:$0xff]
        %v254 = vld [vmem:[%s204] sm:$0xff]
        %v255 = vld [vmem:[%s204 + $0x8] sm:$0xff]
        %v256 = vld [vmem:[%s204 + $0x10] sm:$0xff]
        %v257 = vld [vmem:[%s204 + $0x18] sm:$0xff]
        %v258 = vld [vmem:[%s204 + $0x20] sm:$0xff]
        %v259 = vld [vmem:[%s204 + $0x28] sm:$0xff]
        %v260 = vld [vmem:[%s204 + $0x30] sm:$0xff]
        %v261 = vld [vmem:[%s204 + $0x38] sm:$0xff]
        %v262 = vld [vmem:[%s204 + $0x40] sm:$0xff]
        %v263 = vld [vmem:[%s204 + $0x48] sm:$0xff]
        %v264 = vld [vmem:[%s204 + $0x50] sm:$0xff]
        %v265 = vld [vmem:[%s204 + $0x58] sm:$0xff]
        %v266 = vld [vmem:[%s204 + $0x60] sm:$0xff]
        %v267 = vld [vmem:[%s204 + $0x68] sm:$0xff]
        %v268 = vld [vmem:[%s204 + $0x70] sm:$0xff]
        %v269 = vld [vmem:[%s204 + $0x78] sm:$0xff]
        %v270 = vld [vmem:[%s204 + $0x80] sm:$0xff]
        %v271 = vld [vmem:[%s204 + $0x88] sm:$0xff]
        %v272 = vld [vmem:[%s204 + $0x90] sm:$0xff]
        %v273 = vld [vmem:[%s204 + $0x98] sm:$0xff]
        %v274 = vld [vmem:[%s204 + $0xa0] sm:$0xff]
        %v275 = vld [vmem:[%s204 + $0xa8] sm:$0xff]
        %v276 = vld [vmem:[%s204 + $0xb0] sm:$0xff]
        %v277 = vld [vmem:[%s204 + $0xb8] sm:$0xff]
        %v278 = vld [vmem:[%s204 + $0xc0] sm:$0xff]
        %v279 = vld [vmem:[%s204 + $0xc8] sm:$0xff]
        %v280 = vld [vmem:[%s204 + $0xd0] sm:$0xff]
        %v281 = vld [vmem:[%s204 + $0xd8] sm:$0xff]
        %v282 = vld [vmem:[%s204 + $0xe0] sm:$0xff]
        %v283 = vld [vmem:[%s204 + $0xe8] sm:$0xff]
        %v284 = vld [vmem:[%s204 + $0xf0] sm:$0xff]
        %v285 = vld [vmem:[%s204 + $0xf8] sm:$0xff]
        %v286 = vld [vmem:[%s204 + $0x100] sm:$0xff]
        %v287 = vld [vmem:[%s204 + $0x108] sm:$0xff]
        %v288 = vld [vmem:[%s204 + $0x110] sm:$0xff]
        %v289 = vld [vmem:[%s204 + $0x118] sm:$0xff]
        %v290 = vld [vmem:[%s204 + $0x120] sm:$0xff]
        %v291 = vld [vmem:[%s204 + $0x128] sm:$0xff]
        %v292 = vld [vmem:[%s204 + $0x130] sm:$0xff]
        %v293 = vld [vmem:[%s204 + $0x138] sm:$0xff]
        %v294 = vld [vmem:[%s204 + $0x140] sm:$0xff]
        %v295 = vld [vmem:[%s204 + $0x148] sm:$0xff]
        %v296 = vld [vmem:[%s204 + $0x150] sm:$0xff]
        %v297 = vld [vmem:[%s204 + $0x158] sm:$0xff]
        %v298 = vld [vmem:[%s204 + $0x160] sm:$0xff]
        %v299 = vld [vmem:[%s204 + $0x168] sm:$0xff]
        %v300 = vld [vmem:[%s204 + $0x170] sm:$0xff]
        %v301 = vld [vmem:[%s204 + $0x178] sm:$0xff]
        %v302 = vld [vmem:[%s204 + $0x180] sm:$0xff]
        %v303 = vld [vmem:[%s204 + $0x188] sm:$0xff]
        %v304 = vld [vmem:[%s204 + $0x190] sm:$0xff]
        %v305 = vld [vmem:[%s204 + $0x198] sm:$0xff]
        %v306 = vld [vmem:[%s204 + $0x1a0] sm:$0xff]
        %v307 = vld [vmem:[%s204 + $0x1a8] sm:$0xff]
        %v308 = vld [vmem:[%s204 + $0x1b0] sm:$0xff]
        %v309 = vld [vmem:[%s204 + $0x1b8] sm:$0xff]
        %v310 = vld [vmem:[%s204 + $0x1c0] sm:$0xff]
        %v311 = vld [vmem:[%s204 + $0x1c8] sm:$0xff]
        %v312 = vld [vmem:[%s204 + $0x1d0] sm:$0xff]
        %v313 = vld [vmem:[%s204 + $0x1d8] sm:$0xff]
        %v314 = vld [vmem:[%s204 + $0x1e0] sm:$0xff]
        %v315 = vld [vmem:[%s204 + $0x1e8] sm:$0xff]
        %v316 = vld [vmem:[%s204 + $0x1f0] sm:$0xff]
        %v317 = vld [vmem:[%s204 + $0x1f8] sm:$0xff]
        %v318 = vld [vmem:[%s204 + $0x200] sm:$0xff]
        %v319 = vld [vmem:[%s204 + $0x208] sm:$0xff]
        %v320 = vld [vmem:[%s204 + $0x210] sm:$0xff]
        %v321 = vld [vmem:[%s204 + $0x218] sm:$0xff]
        %v322 = vld [vmem:[%s204 + $0x220] sm:$0xff]
        %v323 = vld [vmem:[%s204 + $0x228] sm:$0xff]
        %v324 = vld [vmem:[%s204 + $0x230] sm:$0xff]
        %v325 = vld [vmem:[%s204 + $0x238] sm:$0xff]
        %v326 = vld [vmem:[%s204 + $0x240] sm:$0xff]
        %v327 = vld [vmem:[%s204 + $0x248] sm:$0xff]
        %v328 = vld [vmem:[%s204 + $0x250] sm:$0xff]
        %v329 = vld [vmem:[%s204 + $0x258] sm:$0xff]
        %v330 = vld [vmem:[%s204 + $0x260] sm:$0xff]
        %v331 = vld [vmem:[%s204 + $0x268] sm:$0xff]
        %v332 = vld [vmem:[%s204 + $0x270] sm:$0xff]
        %v333 = vld [vmem:[%s204 + $0x278] sm:$0xff]
        %v334 = vld [vmem:[%s204 + $0x280] sm:$0xff]
        %v335 = vld [vmem:[%s204 + $0x288] sm:$0xff]
        %v336 = vld [vmem:[%s204 + $0x290] sm:$0xff]
        %v337 = vld [vmem:[%s204 + $0x298] sm:$0xff]
        %v338 = vld [vmem:[%s204 + $0x2a0] sm:$0xff]
        %v339 = vld [vmem:[%s204 + $0x2a8] sm:$0xff]
        %v340 = vld [vmem:[%s204 + $0x2b0] sm:$0xff]
        %v341 = vld [vmem:[%s204 + $0x2b8] sm:$0xff]
        %v342 = vld [vmem:[%s204 + $0x2c0] sm:$0xff]
        %v343 = vld [vmem:[%s204 + $0x2c8] sm:$0xff]
        %v344 = vld [vmem:[%s204 + $0x2d0] sm:$0xff]
        %v345 = vld [vmem:[%s204 + $0x2d8] sm:$0xff]
        %v346 = vld [vmem:[%s204 + $0x2e0] sm:$0xff]
        %v347 = vld [vmem:[%s204 + $0x2e8] sm:$0xff]
        %v348 = vld [vmem:[%s204 + $0x2f0] sm:$0xff]
        %v349 = vld [vmem:[%s204 + $0x2f8] sm:$0xff]
        %v350 = vld [vmem:[%s204 + $0x300] sm:$0xff]
        %v351 = vld [vmem:[%s204 + $0x308] sm:$0xff]
        %v352 = vld [vmem:[%s204 + $0x310] sm:$0xff]
        %v353 = vld [vmem:[%s204 + $0x318] sm:$0xff]
        %v354 = vld [vmem:[%s204 + $0x320] sm:$0xff]
        %v355 = vld [vmem:[%s204 + $0x328] sm:$0xff]
        %v356 = vld [vmem:[%s204 + $0x330] sm:$0xff]
        %v357 = vld [vmem:[%s204 + $0x338] sm:$0xff]
        %v358 = vld [vmem:[%s204 + $0x340] sm:$0xff]
        %v359 = vld [vmem:[%s204 + $0x348] sm:$0xff]
        %v360 = vld [vmem:[%s204 + $0x350] sm:$0xff]
        %v361 = vld [vmem:[%s204 + $0x358] sm:$0xff]
        %v362 = vld [vmem:[%s204 + $0x360] sm:$0xff]
        %v363 = vld [vmem:[%s204 + $0x368] sm:$0xff]
        %v364 = vld [vmem:[%s204 + $0x370] sm:$0xff]
        %v365 = vld [vmem:[%s204 + $0x378] sm:$0xff]
        %v366 = vld [vmem:[%s204 + $0x380] sm:$0xff]
        %v367 = vld [vmem:[%s204 + $0x388] sm:$0xff]
        %v368 = vld [vmem:[%s204 + $0x390] sm:$0xff]
        %v369 = vld [vmem:[%s204 + $0x398] sm:$0xff]
        %v370 = vld [vmem:[%s204 + $0x3a0] sm:$0xff]
        %v371 = vld [vmem:[%s204 + $0x3a8] sm:$0xff]
        %v372 = vld [vmem:[%s204 + $0x3b0] sm:$0xff]
        %v373 = vld [vmem:[%s204 + $0x3b8] sm:$0xff]
        %v374 = vld [vmem:[%s204 + $0x3c0] sm:$0xff]
        %v375 = vld [vmem:[%s204 + $0x3c8] sm:$0xff]
        %v376 = vld [vmem:[%s204 + $0x3d0] sm:$0xff]
        %v377 = vld [vmem:[%s204 + $0x3d8] sm:$0xff]
        %v378 = vld [vmem:[%s204 + $0x3e0] sm:$0xff]
        %v379 = vld [vmem:[%s204 + $0x3e8] sm:$0xff]
        %v380 = vld [vmem:[%s204 + $0x3f0] sm:$0xff]
        %v381 = vld [vmem:[%s204 + $0x3f8] sm:$0xff]
        %v386 = vunpack.c.l.b16 %v250
        %v387 = vunpack.c.h.b16 %v250
        %v388 = vunpack.c.l.b16 %v251
        %v389 = vunpack.c.h.b16 %v251
        %v390 = vunpack.c.l.b16 %v252
        %v391 = vunpack.c.h.b16 %v252
        %v392 = vunpack.c.l.b16 %v253
        %v393 = vunpack.c.h.b16 %v253
        %v394 = vpack.c.b16 %v390, %v386
        %v395 = vpack.c.b16 %v391, %v387
        %v396 = vpack.c.b16 %v392, %v388
        %v397 = vpack.c.b16 %v393, %v389
        %v530 = vunpack.c.l.b16 %v254
        %v531 = vunpack.c.h.b16 %v254
        %v532 = vunpack.c.l.b16 %v255
        %v533 = vunpack.c.h.b16 %v255
        %v534 = vunpack.c.l.b16 %v256
        %v535 = vunpack.c.h.b16 %v256
        %v536 = vunpack.c.l.b16 %v257
        %v537 = vunpack.c.h.b16 %v257
        %v538 = vunpack.c.l.b16 %v258
        %v539 = vunpack.c.h.b16 %v258
        %v540 = vunpack.c.l.b16 %v259
        %v541 = vunpack.c.h.b16 %v259
        %v542 = vunpack.c.l.b16 %v260
        %v543 = vunpack.c.h.b16 %v260
        %v544 = vunpack.c.l.b16 %v261
        %v545 = vunpack.c.h.b16 %v261
        %v546 = vunpack.c.l.b16 %v262
        %v547 = vunpack.c.h.b16 %v262
        %v548 = vunpack.c.l.b16 %v263
        %v549 = vunpack.c.h.b16 %v263
        %v550 = vunpack.c.l.b16 %v264
        %v551 = vunpack.c.h.b16 %v264
        %v552 = vunpack.c.l.b16 %v265
        %v553 = vunpack.c.h.b16 %v265
        %v554 = vunpack.c.l.b16 %v266
        %v555 = vunpack.c.h.b16 %v266
        %v556 = vunpack.c.l.b16 %v267
        %v557 = vunpack.c.h.b16 %v267
        %v558 = vunpack.c.l.b16 %v268
        %v559 = vunpack.c.h.b16 %v268
        %v560 = vunpack.c.l.b16 %v269
        %v561 = vunpack.c.h.b16 %v269
        %v562 = vunpack.c.l.b16 %v270
        %v563 = vunpack.c.h.b16 %v270
        %v564 = vunpack.c.l.b16 %v271
        %v565 = vunpack.c.h.b16 %v271
        %v566 = vunpack.c.l.b16 %v272
        %v567 = vunpack.c.h.b16 %v272
        %v568 = vunpack.c.l.b16 %v273
        %v569 = vunpack.c.h.b16 %v273
        %v570 = vunpack.c.l.b16 %v274
        %v571 = vunpack.c.h.b16 %v274
        %v572 = vunpack.c.l.b16 %v275
        %v573 = vunpack.c.h.b16 %v275
        %v574 = vunpack.c.l.b16 %v276
        %v575 = vunpack.c.h.b16 %v276
        %v576 = vunpack.c.l.b16 %v277
        %v577 = vunpack.c.h.b16 %v277
        %v578 = vunpack.c.l.b16 %v278
        %v579 = vunpack.c.h.b16 %v278
        %v580 = vunpack.c.l.b16 %v279
        %v581 = vunpack.c.h.b16 %v279
        %v582 = vunpack.c.l.b16 %v280
        %v583 = vunpack.c.h.b16 %v280
        %v584 = vunpack.c.l.b16 %v281
        %v585 = vunpack.c.h.b16 %v281
        %v586 = vunpack.c.l.b16 %v282
        %v587 = vunpack.c.h.b16 %v282
        %v588 = vunpack.c.l.b16 %v283
        %v589 = vunpack.c.h.b16 %v283
        %v590 = vunpack.c.l.b16 %v284
        %v591 = vunpack.c.h.b16 %v284
        %v592 = vunpack.c.l.b16 %v285
        %v593 = vunpack.c.h.b16 %v285
        %v594 = vunpack.c.l.b16 %v286
        %v595 = vunpack.c.h.b16 %v286
        %v596 = vunpack.c.l.b16 %v287
        %v597 = vunpack.c.h.b16 %v287
        %v598 = vunpack.c.l.b16 %v288
        %v599 = vunpack.c.h.b16 %v288
        %v600 = vunpack.c.l.b16 %v289
        %v601 = vunpack.c.h.b16 %v289
        %v602 = vunpack.c.l.b16 %v290
        %v603 = vunpack.c.h.b16 %v290
        %v604 = vunpack.c.l.b16 %v291
        %v605 = vunpack.c.h.b16 %v291
        %v606 = vunpack.c.l.b16 %v292
        %v607 = vunpack.c.h.b16 %v292
        %v608 = vunpack.c.l.b16 %v293
        %v609 = vunpack.c.h.b16 %v293
        %v610 = vunpack.c.l.b16 %v294
        %v611 = vunpack.c.h.b16 %v294
        %v612 = vunpack.c.l.b16 %v295
        %v613 = vunpack.c.h.b16 %v295
        %v614 = vunpack.c.l.b16 %v296
        %v615 = vunpack.c.h.b16 %v296
        %v616 = vunpack.c.l.b16 %v297
        %v617 = vunpack.c.h.b16 %v297
        %v618 = vunpack.c.l.b16 %v298
        %v619 = vunpack.c.h.b16 %v298
        %v620 = vunpack.c.l.b16 %v299
        %v621 = vunpack.c.h.b16 %v299
        %v622 = vunpack.c.l.b16 %v300
        %v623 = vunpack.c.h.b16 %v300
        %v624 = vunpack.c.l.b16 %v301
        %v625 = vunpack.c.h.b16 %v301
        %v626 = vunpack.c.l.b16 %v302
        %v627 = vunpack.c.h.b16 %v302
        %v628 = vunpack.c.l.b16 %v303
        %v629 = vunpack.c.h.b16 %v303
        %v630 = vunpack.c.l.b16 %v304
        %v631 = vunpack.c.h.b16 %v304
        %v632 = vunpack.c.l.b16 %v305
        %v633 = vunpack.c.h.b16 %v305
        %v634 = vunpack.c.l.b16 %v306
        %v635 = vunpack.c.h.b16 %v306
        %v636 = vunpack.c.l.b16 %v307
        %v637 = vunpack.c.h.b16 %v307
        %v638 = vunpack.c.l.b16 %v308
        %v639 = vunpack.c.h.b16 %v308
        %v640 = vunpack.c.l.b16 %v309
        %v641 = vunpack.c.h.b16 %v309
        %v642 = vunpack.c.l.b16 %v310
        %v643 = vunpack.c.h.b16 %v310
        %v644 = vunpack.c.l.b16 %v311
        %v645 = vunpack.c.h.b16 %v311
        %v646 = vunpack.c.l.b16 %v312
        %v647 = vunpack.c.h.b16 %v312
        %v648 = vunpack.c.l.b16 %v313
        %v649 = vunpack.c.h.b16 %v313
        %v650 = vunpack.c.l.b16 %v314
        %v651 = vunpack.c.h.b16 %v314
        %v652 = vunpack.c.l.b16 %v315
        %v653 = vunpack.c.h.b16 %v315
        %v654 = vunpack.c.l.b16 %v316
        %v655 = vunpack.c.h.b16 %v316
        %v656 = vunpack.c.l.b16 %v317
        %v657 = vunpack.c.h.b16 %v317
        %v658 = vunpack.c.l.b16 %v318
        %v659 = vunpack.c.h.b16 %v318
        %v660 = vunpack.c.l.b16 %v319
        %v661 = vunpack.c.h.b16 %v319
        %v662 = vunpack.c.l.b16 %v320
        %v663 = vunpack.c.h.b16 %v320
        %v664 = vunpack.c.l.b16 %v321
        %v665 = vunpack.c.h.b16 %v321
        %v666 = vunpack.c.l.b16 %v322
        %v667 = vunpack.c.h.b16 %v322
        %v668 = vunpack.c.l.b16 %v323
        %v669 = vunpack.c.h.b16 %v323
        %v670 = vunpack.c.l.b16 %v324
        %v671 = vunpack.c.h.b16 %v324
        %v672 = vunpack.c.l.b16 %v325
        %v673 = vunpack.c.h.b16 %v325
        %v674 = vunpack.c.l.b16 %v326
        %v675 = vunpack.c.h.b16 %v326
        %v676 = vunpack.c.l.b16 %v327
        %v677 = vunpack.c.h.b16 %v327
        %v678 = vunpack.c.l.b16 %v328
        %v679 = vunpack.c.h.b16 %v328
        %v680 = vunpack.c.l.b16 %v329
        %v681 = vunpack.c.h.b16 %v329
        %v682 = vunpack.c.l.b16 %v330
        %v683 = vunpack.c.h.b16 %v330
        %v684 = vunpack.c.l.b16 %v331
        %v685 = vunpack.c.h.b16 %v331
        %v686 = vunpack.c.l.b16 %v332
        %v687 = vunpack.c.h.b16 %v332
        %v688 = vunpack.c.l.b16 %v333
        %v689 = vunpack.c.h.b16 %v333
        %v690 = vunpack.c.l.b16 %v334
        %v691 = vunpack.c.h.b16 %v334
        %v692 = vunpack.c.l.b16 %v335
        %v693 = vunpack.c.h.b16 %v335
        %v694 = vunpack.c.l.b16 %v336
        %v695 = vunpack.c.h.b16 %v336
        %v696 = vunpack.c.l.b16 %v337
        %v697 = vunpack.c.h.b16 %v337
        %v698 = vunpack.c.l.b16 %v338
        %v699 = vunpack.c.h.b16 %v338
        %v700 = vunpack.c.l.b16 %v339
        %v701 = vunpack.c.h.b16 %v339
        %v702 = vunpack.c.l.b16 %v340
        %v703 = vunpack.c.h.b16 %v340
        %v704 = vunpack.c.l.b16 %v341
        %v705 = vunpack.c.h.b16 %v341
        %v706 = vunpack.c.l.b16 %v342
        %v707 = vunpack.c.h.b16 %v342
        %v708 = vunpack.c.l.b16 %v343
        %v709 = vunpack.c.h.b16 %v343
        %v710 = vunpack.c.l.b16 %v344
        %v711 = vunpack.c.h.b16 %v344
        %v712 = vunpack.c.l.b16 %v345
        %v713 = vunpack.c.h.b16 %v345
        %v714 = vunpack.c.l.b16 %v346
        %v715 = vunpack.c.h.b16 %v346
        %v716 = vunpack.c.l.b16 %v347
        %v717 = vunpack.c.h.b16 %v347
        %v718 = vunpack.c.l.b16 %v348
        %v719 = vunpack.c.h.b16 %v348
        %v720 = vunpack.c.l.b16 %v349
        %v721 = vunpack.c.h.b16 %v349
        %v722 = vunpack.c.l.b16 %v350
        %v723 = vunpack.c.h.b16 %v350
        %v724 = vunpack.c.l.b16 %v351
        %v725 = vunpack.c.h.b16 %v351
        %v726 = vunpack.c.l.b16 %v352
        %v727 = vunpack.c.h.b16 %v352
        %v728 = vunpack.c.l.b16 %v353
        %v729 = vunpack.c.h.b16 %v353
        %v730 = vunpack.c.l.b16 %v354
        %v731 = vunpack.c.h.b16 %v354
        %v732 = vunpack.c.l.b16 %v355
        %v733 = vunpack.c.h.b16 %v355
        %v734 = vunpack.c.l.b16 %v356
        %v735 = vunpack.c.h.b16 %v356
        %v736 = vunpack.c.l.b16 %v357
        %v737 = vunpack.c.h.b16 %v357
        %v738 = vunpack.c.l.b16 %v358
        %v739 = vunpack.c.h.b16 %v358
        %v740 = vunpack.c.l.b16 %v359
        %v741 = vunpack.c.h.b16 %v359
        %v742 = vunpack.c.l.b16 %v360
        %v743 = vunpack.c.h.b16 %v360
        %v744 = vunpack.c.l.b16 %v361
        %v745 = vunpack.c.h.b16 %v361
        %v746 = vunpack.c.l.b16 %v362
        %v747 = vunpack.c.h.b16 %v362
        %v748 = vunpack.c.l.b16 %v363
        %v749 = vunpack.c.h.b16 %v363
        %v750 = vunpack.c.l.b16 %v364
        %v751 = vunpack.c.h.b16 %v364
        %v752 = vunpack.c.l.b16 %v365
        %v753 = vunpack.c.h.b16 %v365
        %v754 = vunpack.c.l.b16 %v366
        %v755 = vunpack.c.h.b16 %v366
        %v756 = vunpack.c.l.b16 %v367
        %v757 = vunpack.c.h.b16 %v367
        %v758 = vunpack.c.l.b16 %v368
        %v759 = vunpack.c.h.b16 %v368
        %v760 = vunpack.c.l.b16 %v369
        %v761 = vunpack.c.h.b16 %v369
        %v762 = vunpack.c.l.b16 %v370
        %v763 = vunpack.c.h.b16 %v370
        %v764 = vunpack.c.l.b16 %v371
        %v765 = vunpack.c.h.b16 %v371
        %v766 = vunpack.c.l.b16 %v372
        %v767 = vunpack.c.h.b16 %v372
        %v768 = vunpack.c.l.b16 %v373
        %v769 = vunpack.c.h.b16 %v373
        %v770 = vunpack.c.l.b16 %v374
        %v771 = vunpack.c.h.b16 %v374
        %v772 = vunpack.c.l.b16 %v375
        %v773 = vunpack.c.h.b16 %v375
        %v774 = vunpack.c.l.b16 %v376
        %v775 = vunpack.c.h.b16 %v376
        %v776 = vunpack.c.l.b16 %v377
        %v777 = vunpack.c.h.b16 %v377
        %v778 = vunpack.c.l.b16 %v378
        %v779 = vunpack.c.h.b16 %v378
        %v780 = vunpack.c.l.b16 %v379
        %v781 = vunpack.c.h.b16 %v379
        %v782 = vunpack.c.l.b16 %v380
        %v783 = vunpack.c.h.b16 %v380
        %v784 = vunpack.c.l.b16 %v381
        %v785 = vunpack.c.h.b16 %v381
        %v786 = vpack.c.b16 %v534, %v530
        %v787 = vpack.c.b16 %v535, %v531
        %v788 = vpack.c.b16 %v536, %v532
        %v789 = vpack.c.b16 %v537, %v533
        %v790 = vpack.c.b16 %v542, %v538
        %v791 = vpack.c.b16 %v543, %v539
        %v792 = vpack.c.b16 %v544, %v540
        %v793 = vpack.c.b16 %v545, %v541
        %v794 = vpack.c.b16 %v550, %v546
        %v795 = vpack.c.b16 %v551, %v547
        %v796 = vpack.c.b16 %v552, %v548
        %v797 = vpack.c.b16 %v553, %v549
        %v798 = vpack.c.b16 %v558, %v554
        %v799 = vpack.c.b16 %v559, %v555
        %v800 = vpack.c.b16 %v560, %v556
        %v801 = vpack.c.b16 %v561, %v557
        %v802 = vpack.c.b16 %v566, %v562
        %v803 = vpack.c.b16 %v567, %v563
        %v804 = vpack.c.b16 %v568, %v564
        %v805 = vpack.c.b16 %v569, %v565
        %v806 = vpack.c.b16 %v574, %v570
        %v807 = vpack.c.b16 %v575, %v571
        %v808 = vpack.c.b16 %v576, %v572
        %v809 = vpack.c.b16 %v577, %v573
        %v810 = vpack.c.b16 %v582, %v578
        %v811 = vpack.c.b16 %v583, %v579
        %v812 = vpack.c.b16 %v584, %v580
        %v813 = vpack.c.b16 %v585, %v581
        %v814 = vpack.c.b16 %v590, %v586
        %v815 = vpack.c.b16 %v591, %v587
        %v816 = vpack.c.b16 %v592, %v588
        %v817 = vpack.c.b16 %v593, %v589
        %v818 = vpack.c.b16 %v598, %v594
        %v819 = vpack.c.b16 %v599, %v595
        %v820 = vpack.c.b16 %v600, %v596
        %v821 = vpack.c.b16 %v601, %v597
        %v822 = vpack.c.b16 %v606, %v602
        %v823 = vpack.c.b16 %v607, %v603
        %v824 = vpack.c.b16 %v608, %v604
        %v825 = vpack.c.b16 %v609, %v605
        %v826 = vpack.c.b16 %v614, %v610
        %v827 = vpack.c.b16 %v615, %v611
        %v828 = vpack.c.b16 %v616, %v612
        %v829 = vpack.c.b16 %v617, %v613
        %v830 = vpack.c.b16 %v622, %v618
        %v831 = vpack.c.b16 %v623, %v619
        %v832 = vpack.c.b16 %v624, %v620
        %v833 = vpack.c.b16 %v625, %v621
        %v834 = vpack.c.b16 %v630, %v626
        %v835 = vpack.c.b16 %v631, %v627
        %v836 = vpack.c.b16 %v632, %v628
        %v837 = vpack.c.b16 %v633, %v629
        %v838 = vpack.c.b16 %v638, %v634
        %v839 = vpack.c.b16 %v639, %v635
        %v840 = vpack.c.b16 %v640, %v636
        %v841 = vpack.c.b16 %v641, %v637
        %v842 = vpack.c.b16 %v646, %v642
        %v843 = vpack.c.b16 %v647, %v643
        %v844 = vpack.c.b16 %v648, %v644
        %v845 = vpack.c.b16 %v649, %v645
        %v846 = vpack.c.b16 %v654, %v650
        %v847 = vpack.c.b16 %v655, %v651
        %v848 = vpack.c.b16 %v656, %v652
        %v849 = vpack.c.b16 %v657, %v653
        %v850 = vpack.c.b16 %v662, %v658
        %v851 = vpack.c.b16 %v663, %v659
        %v852 = vpack.c.b16 %v664, %v660
        %v853 = vpack.c.b16 %v665, %v661
        %v854 = vpack.c.b16 %v670, %v666
        %v855 = vpack.c.b16 %v671, %v667
        %v856 = vpack.c.b16 %v672, %v668
        %v857 = vpack.c.b16 %v673, %v669
        %v858 = vpack.c.b16 %v678, %v674
        %v859 = vpack.c.b16 %v679, %v675
        %v860 = vpack.c.b16 %v680, %v676
        %v861 = vpack.c.b16 %v681, %v677
        %v862 = vpack.c.b16 %v686, %v682
        %v863 = vpack.c.b16 %v687, %v683
        %v864 = vpack.c.b16 %v688, %v684
        %v865 = vpack.c.b16 %v689, %v685
        %v866 = vpack.c.b16 %v694, %v690
        %v867 = vpack.c.b16 %v695, %v691
        %v868 = vpack.c.b16 %v696, %v692
        %v869 = vpack.c.b16 %v697, %v693
        %v870 = vpack.c.b16 %v702, %v698
        %v871 = vpack.c.b16 %v703, %v699
        %v872 = vpack.c.b16 %v704, %v700
        %v873 = vpack.c.b16 %v705, %v701
        %v874 = vpack.c.b16 %v710, %v706
        %v875 = vpack.c.b16 %v711, %v707
        %v876 = vpack.c.b16 %v712, %v708
        %v877 = vpack.c.b16 %v713, %v709
        %v878 = vpack.c.b16 %v718, %v714
        %v879 = vpack.c.b16 %v719, %v715
        %v880 = vpack.c.b16 %v720, %v716
        %v881 = vpack.c.b16 %v721, %v717
        %v882 = vpack.c.b16 %v726, %v722
        %v883 = vpack.c.b16 %v727, %v723
        %v884 = vpack.c.b16 %v728, %v724
        %v885 = vpack.c.b16 %v729, %v725
        %v886 = vpack.c.b16 %v734, %v730
        %v887 = vpack.c.b16 %v735, %v731
        %v888 = vpack.c.b16 %v736, %v732
        %v889 = vpack.c.b16 %v737, %v733
        %v890 = vpack.c.b16 %v742, %v738
        %v891 = vpack.c.b16 %v743, %v739
        %v892 = vpack.c.b16 %v744, %v740
        %v893 = vpack.c.b16 %v745, %v741
        %v894 = vpack.c.b16 %v750, %v746
        %v895 = vpack.c.b16 %v751, %v747
        %v896 = vpack.c.b16 %v752, %v748
        %v897 = vpack.c.b16 %v753, %v749
        %v898 = vpack.c.b16 %v758, %v754
        %v899 = vpack.c.b16 %v759, %v755
        %v900 = vpack.c.b16 %v760, %v756
        %v901 = vpack.c.b16 %v761, %v757
        %v902 = vpack.c.b16 %v766, %v762
        %v903 = vpack.c.b16 %v767, %v763
        %v904 = vpack.c.b16 %v768, %v764
        %v905 = vpack.c.b16 %v769, %v765
        %v906 = vpack.c.b16 %v774, %v770
        %v907 = vpack.c.b16 %v775, %v771
        %v908 = vpack.c.b16 %v776, %v772
        %v909 = vpack.c.b16 %v777, %v773
        %v910 = vpack.c.b16 %v782, %v778
        %v911 = vpack.c.b16 %v783, %v779
        %v912 = vpack.c.b16 %v784, %v780
        %v913 = vpack.c.b16 %v785, %v781
        %1042 = vmatprep.subr.bf16.mxu0 %v815
        %1043 = vmatpush1.bf16.msra.mxu0 %v814
        %1044 = vmatprep.subr.bf16.mxu0 %v811
        %1045 = vmatpush1.bf16.msra.mxu0 %v810
        %1046 = vmatprep.subr.bf16.mxu0 %v807
        %1047 = vmatpush1.bf16.msra.mxu0 %v806
        %1048 = vmatprep.subr.bf16.mxu0 %v803
        %1049 = vmatpush1.bf16.msra.mxu0 %v802
        %1050 = vmatprep.subr.bf16.mxu0 %v799
        %1051 = vmatpush1.bf16.msra.mxu0 %v798
        %1052 = vmatprep.subr.bf16.mxu0 %v795
        %1053 = vmatpush1.bf16.msra.mxu0 %v794
        %1054 = vmatprep.subr.bf16.mxu0 %v791
        %1055 = vmatpush1.bf16.msra.mxu0 %v790
        %1056 = vmatprep.subr.bf16.mxu0 %v787
        %1057 = vmatpush1.bf16.msra.mxu0 %v786
        %1058 = vmatprep.subr.bf16.mxu0 %v847
        %1059 = vmatpush2.bf16.msra.mxu0 %v846
        %1060 = vmatprep.subr.bf16.mxu0 %v843
        %1061 = vmatpush2.bf16.msra.mxu0 %v842
        %1062 = vmatprep.subr.bf16.mxu0 %v839
        %1063 = vmatpush2.bf16.msra.mxu0 %v838
        %1064 = vmatprep.subr.bf16.mxu0 %v835
        %1065 = vmatpush2.bf16.msra.mxu0 %v834
        %1066 = vmatprep.subr.bf16.mxu0 %v831
        %1067 = vmatpush2.bf16.msra.mxu0 %v830
        %1068 = vmatprep.subr.bf16.mxu0 %v827
        %1069 = vmatpush2.bf16.msra.mxu0 %v826
        %1070 = vmatprep.subr.bf16.mxu0 %v823
        %1071 = vmatpush2.bf16.msra.mxu0 %v822
        %1072 = vmatprep.subr.bf16.mxu0 %v819
        %1073 = vmatpush2.bf16.msra.mxu0 %v818
        %1074 = vmatprep.mubr.bf16.mxu0 %v395
        %1075 = vmatmul.mubr.bf16.gmra.mxu0 %v394
        %v1076 = vpop.f32.mrf.mxu0
        %v1077 = vadd.f32 0.0, %v1076
        %v1078 = vpop.f32.mrf.mxu0
        %v1079 = vadd.f32 0.0, %v1078
        %v1080 = vpop.f32.mrf.mxu0
        %v1081 = vadd.f32 0.0, %v1080
        %v1082 = vpop.f32.mrf.mxu0
        %v1083 = vadd.f32 0.0, %v1082
        %1084 = vdwg.mxu0
        %1085 = vmatprep.subr.bf16.mxu0 %v879
        %1086 = vmatpush1.bf16.msra.mxu0 %v878
        %1087 = vmatprep.subr.bf16.mxu0 %v875
        %1088 = vmatpush1.bf16.msra.mxu0 %v874
        %1089 = vmatprep.subr.bf16.mxu0 %v871
        %1090 = vmatpush1.bf16.msra.mxu0 %v870
        %1091 = vmatprep.subr.bf16.mxu0 %v867
        %1092 = vmatpush1.bf16.msra.mxu0 %v866
        %1093 = vmatprep.subr.bf16.mxu0 %v863
        %1094 = vmatpush1.bf16.msra.mxu0 %v862
        %1095 = vmatprep.subr.bf16.mxu0 %v859
        %1096 = vmatpush1.bf16.msra.mxu0 %v858
        %1097 = vmatprep.subr.bf16.mxu0 %v855
        %1098 = vmatpush1.bf16.msra.mxu0 %v854
        %1099 = vmatprep.subr.bf16.mxu0 %v851
        %1100 = vmatpush1.bf16.msra.mxu0 %v850
        %1101 = vmatprep.subr.bf16.mxu0 %v911
        %1102 = vmatpush2.bf16.msra.mxu0 %v910
        %1103 = vmatprep.subr.bf16.mxu0 %v907
        %1104 = vmatpush2.bf16.msra.mxu0 %v906
        %1105 = vmatprep.subr.bf16.mxu0 %v903
        %1106 = vmatpush2.bf16.msra.mxu0 %v902
        %1107 = vmatprep.subr.bf16.mxu0 %v899
        %1108 = vmatpush2.bf16.msra.mxu0 %v898
        %1109 = vmatprep.subr.bf16.mxu0 %v895
        %1110 = vmatpush2.bf16.msra.mxu0 %v894
        %1111 = vmatprep.subr.bf16.mxu0 %v891
        %1112 = vmatpush2.bf16.msra.mxu0 %v890
        %1113 = vmatprep.subr.bf16.mxu0 %v887
        %1114 = vmatpush2.bf16.msra.mxu0 %v886
        %1115 = vmatprep.subr.bf16.mxu0 %v883
        %1116 = vmatpush2.bf16.msra.mxu0 %v882
        %1117 = vmatprep.mubr.bf16.mxu0 %v397
        %1118 = vmatmul.mubr.bf16.gmra.mxu0 %v396
        %v1119 = vpop.f32.mrf.mxu0
        %v1120 = vadd.f32 %v1077, %v1119
        %v1121 = vpop.f32.mrf.mxu0
        %v1122 = vadd.f32 %v1079, %v1121
        %v1123 = vpop.f32.mrf.mxu0
        %v1124 = vadd.f32 %v1081, %v1123
        %v1125 = vpop.f32.mrf.mxu0
        %v1126 = vadd.f32 %v1083, %v1125
        %1127 = vdwg.mxu0
        %1128 = vmatprep.subr.bf16.mxu0 %v817
        %1129 = vmatpush1.bf16.msra.mxu0 %v816
        %1130 = vmatprep.subr.bf16.mxu0 %v813
        %1131 = vmatpush1.bf16.msra.mxu0 %v812
        %1132 = vmatprep.subr.bf16.mxu0 %v809
        %1133 = vmatpush1.bf16.msra.mxu0 %v808
        %1134 = vmatprep.subr.bf16.mxu0 %v805
        %1135 = vmatpush1.bf16.msra.mxu0 %v804
        %1136 = vmatprep.subr.bf16.mxu0 %v801
        %1137 = vmatpush1.bf16.msra.mxu0 %v800
        %1138 = vmatprep.subr.bf16.mxu0 %v797
        %1139 = vmatpush1.bf16.msra.mxu0 %v796
        %1140 = vmatprep.subr.bf16.mxu0 %v793
        %1141 = vmatpush1.bf16.msra.mxu0 %v792
        %1142 = vmatprep.subr.bf16.mxu0 %v789
        %1143 = vmatpush1.bf16.msra.mxu0 %v788
        %1144 = vmatprep.subr.bf16.mxu0 %v849
        %1145 = vmatpush2.bf16.msra.mxu0 %v848
        %1146 = vmatprep.subr.bf16.mxu0 %v845
        %1147 = vmatpush2.bf16.msra.mxu0 %v844
        %1148 = vmatprep.subr.bf16.mxu0 %v841
        %1149 = vmatpush2.bf16.msra.mxu0 %v840
        %1150 = vmatprep.subr.bf16.mxu0 %v837
        %1151 = vmatpush2.bf16.msra.mxu0 %v836
        %1152 = vmatprep.subr.bf16.mxu0 %v833
        %1153 = vmatpush2.bf16.msra.mxu0 %v832
        %1154 = vmatprep.subr.bf16.mxu0 %v829
        %1155 = vmatpush2.bf16.msra.mxu0 %v828
        %1156 = vmatprep.subr.bf16.mxu0 %v825
        %1157 = vmatpush2.bf16.msra.mxu0 %v824
        %1158 = vmatprep.subr.bf16.mxu0 %v821
        %1159 = vmatpush2.bf16.msra.mxu0 %v820
        %1160 = vmatprep.mubr.bf16.mxu0 %v395
        %1161 = vmatmul.mubr.bf16.gmra.mxu0 %v394
        %v1162 = vpop.f32.mrf.mxu0
        %v1163 = vadd.f32 0.0, %v1162
        %v1164 = vpop.f32.mrf.mxu0
        %v1165 = vadd.f32 0.0, %v1164
        %v1166 = vpop.f32.mrf.mxu0
        %v1167 = vadd.f32 0.0, %v1166
        %v1168 = vpop.f32.mrf.mxu0
        %v1169 = vadd.f32 0.0, %v1168
        %1170 = vdwg.mxu0
        %1171 = vmatprep.subr.bf16.mxu0 %v881
        %1172 = vmatpush1.bf16.msra.mxu0 %v880
        %1173 = vmatprep.subr.bf16.mxu0 %v877
        %1174 = vmatpush1.bf16.msra.mxu0 %v876
        %1175 = vmatprep.subr.bf16.mxu0 %v873
        %1176 = vmatpush1.bf16.msra.mxu0 %v872
        %1177 = vmatprep.subr.bf16.mxu0 %v869
        %1178 = vmatpush1.bf16.msra.mxu0 %v868
        %1179 = vmatprep.subr.bf16.mxu0 %v865
        %1180 = vmatpush1.bf16.msra.mxu0 %v864
        %1181 = vmatprep.subr.bf16.mxu0 %v861
        %1182 = vmatpush1.bf16.msra.mxu0 %v860
        %1183 = vmatprep.subr.bf16.mxu0 %v857
        %1184 = vmatpush1.bf16.msra.mxu0 %v856
        %1185 = vmatprep.subr.bf16.mxu0 %v853
        %1186 = vmatpush1.bf16.msra.mxu0 %v852
        %1187 = vmatprep.subr.bf16.mxu0 %v913
        %1188 = vmatpush2.bf16.msra.mxu0 %v912
        %1189 = vmatprep.subr.bf16.mxu0 %v909
        %1190 = vmatpush2.bf16.msra.mxu0 %v908
        %1191 = vmatprep.subr.bf16.mxu0 %v905
        %1192 = vmatpush2.bf16.msra.mxu0 %v904
        %1193 = vmatprep.subr.bf16.mxu0 %v901
        %1194 = vmatpush2.bf16.msra.mxu0 %v900
        %1195 = vmatprep.subr.bf16.mxu0 %v897
        %1196 = vmatpush2.bf16.msra.mxu0 %v896
        %1197 = vmatprep.subr.bf16.mxu0 %v893
        %1198 = vmatpush2.bf16.msra.mxu0 %v892
        %1199 = vmatprep.subr.bf16.mxu0 %v889
        %1200 = vmatpush2.bf16.msra.mxu0 %v888
        %1201 = vmatprep.subr.bf16.mxu0 %v885
        %1202 = vmatpush2.bf16.msra.mxu0 %v884
        %1203 = vmatprep.mubr.bf16.mxu0 %v397
        %1204 = vmatmul.mubr.bf16.gmra.mxu0 %v396
        %v1205 = vpop.f32.mrf.mxu0
        %v1206 = vadd.f32 %v1163, %v1205
        %v1207 = vpop.f32.mrf.mxu0
        %v1208 = vadd.f32 %v1165, %v1207
        %v1209 = vpop.f32.mrf.mxu0
        %v1210 = vadd.f32 %v1167, %v1209
        %v1211 = vpop.f32.mrf.mxu0
        %v1212 = vadd.f32 %v1169, %v1211
        %1213 = vdwg.mxu0
        %v1214 = vmul.f32 %v1120, %v1120
        %v1215 = vmul.f32 %v1122, %v1122
        %v1216 = vmul.f32 %v1206, %v1206
        %v1217 = vmul.f32 %v1208, %v1208
        %v1218 = vmul.f32 %v1124, %v1124
        %v1219 = vmul.f32 %v1126, %v1126
        %v1220 = vmul.f32 %v1210, %v1210
        %v1221 = vmul.f32 %v1212, %v1212
        %v1222 = vld [vmem:[#allocation2] sm:$0xff]
        %v1223 = vld [vmem:[#allocation2 + $0x8] sm:$0xff]
        %v1224 = vld [vmem:[%s241] sm:$0xff]
        %v1225 = vld [vmem:[%s241 + $0x8] sm:$0xff]
        %v1226 = vld [vmem:[%s241 + $0x10] sm:$0xff]
        %v1227 = vld [vmem:[%s241 + $0x18] sm:$0xff]
        %v1228 = vld [vmem:[%s241 + $0x20] sm:$0xff]
        %v1229 = vld [vmem:[%s241 + $0x28] sm:$0xff]
        %v1230 = vld [vmem:[%s241 + $0x30] sm:$0xff]
        %v1231 = vld [vmem:[%s241 + $0x38] sm:$0xff]
        %v1232 = vld [vmem:[%s241 + $0x40] sm:$0xff]
        %v1233 = vld [vmem:[%s241 + $0x48] sm:$0xff]
        %v1234 = vld [vmem:[%s241 + $0x50] sm:$0xff]
        %v1235 = vld [vmem:[%s241 + $0x58] sm:$0xff]
        %v1236 = vld [vmem:[%s241 + $0x60] sm:$0xff]
        %v1237 = vld [vmem:[%s241 + $0x68] sm:$0xff]
        %v1238 = vld [vmem:[%s241 + $0x70] sm:$0xff]
        %v1239 = vld [vmem:[%s241 + $0x78] sm:$0xff]
        %v1240 = vld [vmem:[%s241 + $0x80] sm:$0xff]
        %v1241 = vld [vmem:[%s241 + $0x88] sm:$0xff]
        %v1242 = vld [vmem:[%s241 + $0x90] sm:$0xff]
        %v1243 = vld [vmem:[%s241 + $0x98] sm:$0xff]
        %v1244 = vld [vmem:[%s241 + $0xa0] sm:$0xff]
        %v1245 = vld [vmem:[%s241 + $0xa8] sm:$0xff]
        %v1246 = vld [vmem:[%s241 + $0xb0] sm:$0xff]
        %v1247 = vld [vmem:[%s241 + $0xb8] sm:$0xff]
        %v1248 = vld [vmem:[%s241 + $0xc0] sm:$0xff]
        %v1249 = vld [vmem:[%s241 + $0xc8] sm:$0xff]
        %v1250 = vld [vmem:[%s241 + $0xd0] sm:$0xff]
        %v1251 = vld [vmem:[%s241 + $0xd8] sm:$0xff]
        %v1252 = vld [vmem:[%s241 + $0xe0] sm:$0xff]
        %v1253 = vld [vmem:[%s241 + $0xe8] sm:$0xff]
        %v1254 = vld [vmem:[%s241 + $0xf0] sm:$0xff]
        %v1255 = vld [vmem:[%s241 + $0xf8] sm:$0xff]
        %v1256 = vld [vmem:[%s241 + $0x100] sm:$0xff]
        %v1257 = vld [vmem:[%s241 + $0x108] sm:$0xff]
        %v1258 = vld [vmem:[%s241 + $0x110] sm:$0xff]
        %v1259 = vld [vmem:[%s241 + $0x118] sm:$0xff]
        %v1260 = vld [vmem:[%s241 + $0x120] sm:$0xff]
        %v1261 = vld [vmem:[%s241 + $0x128] sm:$0xff]
        %v1262 = vld [vmem:[%s241 + $0x130] sm:$0xff]
        %v1263 = vld [vmem:[%s241 + $0x138] sm:$0xff]
        %v1264 = vld [vmem:[%s241 + $0x140] sm:$0xff]
        %v1265 = vld [vmem:[%s241 + $0x148] sm:$0xff]
        %v1266 = vld [vmem:[%s241 + $0x150] sm:$0xff]
        %v1267 = vld [vmem:[%s241 + $0x158] sm:$0xff]
        %v1268 = vld [vmem:[%s241 + $0x160] sm:$0xff]
        %v1269 = vld [vmem:[%s241 + $0x168] sm:$0xff]
        %v1270 = vld [vmem:[%s241 + $0x170] sm:$0xff]
        %v1271 = vld [vmem:[%s241 + $0x178] sm:$0xff]
        %v1272 = vld [vmem:[%s241 + $0x180] sm:$0xff]
        %v1273 = vld [vmem:[%s241 + $0x188] sm:$0xff]
        %v1274 = vld [vmem:[%s241 + $0x190] sm:$0xff]
        %v1275 = vld [vmem:[%s241 + $0x198] sm:$0xff]
        %v1276 = vld [vmem:[%s241 + $0x1a0] sm:$0xff]
        %v1277 = vld [vmem:[%s241 + $0x1a8] sm:$0xff]
        %v1278 = vld [vmem:[%s241 + $0x1b0] sm:$0xff]
        %v1279 = vld [vmem:[%s241 + $0x1b8] sm:$0xff]
        %v1280 = vld [vmem:[%s241 + $0x1c0] sm:$0xff]
        %v1281 = vld [vmem:[%s241 + $0x1c8] sm:$0xff]
        %v1282 = vld [vmem:[%s241 + $0x1d0] sm:$0xff]
        %v1283 = vld [vmem:[%s241 + $0x1d8] sm:$0xff]
        %v1284 = vld [vmem:[%s241 + $0x1e0] sm:$0xff]
        %v1285 = vld [vmem:[%s241 + $0x1e8] sm:$0xff]
        %v1286 = vld [vmem:[%s241 + $0x1f0] sm:$0xff]
        %v1287 = vld [vmem:[%s241 + $0x1f8] sm:$0xff]
        %1288 = vmatprep.subr.mxu0 0.0
        %1289 = vmatpush1.msra.mxu0 %v1239
        %1290 = vmatprep.subr.mxu0 0.0
        %1291 = vmatpush1.msra.mxu0 %v1238
        %1292 = vmatprep.subr.mxu0 0.0
        %1293 = vmatpush1.msra.mxu0 %v1237
        %1294 = vmatprep.subr.mxu0 0.0
        %1295 = vmatpush1.msra.mxu0 %v1236
        %1296 = vmatprep.subr.mxu0 0.0
        %1297 = vmatpush1.msra.mxu0 %v1235
        %1298 = vmatprep.subr.mxu0 0.0
        %1299 = vmatpush1.msra.mxu0 %v1234
        %1300 = vmatprep.subr.mxu0 0.0
        %1301 = vmatpush1.msra.mxu0 %v1233
        %1302 = vmatprep.subr.mxu0 0.0
        %1303 = vmatpush1.msra.mxu0 %v1232
        %1304 = vmatprep.subr.mxu0 0.0
        %1305 = vmatpush1.msra.mxu0 %v1231
        %1306 = vmatprep.subr.mxu0 0.0
        %1307 = vmatpush1.msra.mxu0 %v1230
        %1308 = vmatprep.subr.mxu0 0.0
        %1309 = vmatpush1.msra.mxu0 %v1229
        %1310 = vmatprep.subr.mxu0 0.0
        %1311 = vmatpush1.msra.mxu0 %v1228
        %1312 = vmatprep.subr.mxu0 0.0
        %1313 = vmatpush1.msra.mxu0 %v1227
        %1314 = vmatprep.subr.mxu0 0.0
        %1315 = vmatpush1.msra.mxu0 %v1226
        %1316 = vmatprep.subr.mxu0 0.0
        %1317 = vmatpush1.msra.mxu0 %v1225
        %1318 = vmatprep.subr.mxu0 0.0
        %1319 = vmatpush1.msra.mxu0 %v1224
        %1320 = vmatprep.subr.mxu0 0.0
        %1321 = vmatpush2.msra.mxu0 %v1255
        %1322 = vmatprep.subr.mxu0 0.0
        %1323 = vmatpush2.msra.mxu0 %v1254
        %1324 = vmatprep.subr.mxu0 0.0
        %1325 = vmatpush2.msra.mxu0 %v1253
        %1326 = vmatprep.subr.mxu0 0.0
        %1327 = vmatpush2.msra.mxu0 %v1252
        %1328 = vmatprep.subr.mxu0 0.0
        %1329 = vmatpush2.msra.mxu0 %v1251
        %1330 = vmatprep.subr.mxu0 0.0
        %1331 = vmatpush2.msra.mxu0 %v1250
        %1332 = vmatprep.subr.mxu0 0.0
        %1333 = vmatpush2.msra.mxu0 %v1249
        %1334 = vmatprep.subr.mxu0 0.0
        %1335 = vmatpush2.msra.mxu0 %v1248
        %1336 = vmatprep.subr.mxu0 0.0
        %1337 = vmatpush2.msra.mxu0 %v1247
        %1338 = vmatprep.subr.mxu0 0.0
        %1339 = vmatpush2.msra.mxu0 %v1246
        %1340 = vmatprep.subr.mxu0 0.0
        %1341 = vmatpush2.msra.mxu0 %v1245
        %1342 = vmatprep.subr.mxu0 0.0
        %1343 = vmatpush2.msra.mxu0 %v1244
        %1344 = vmatprep.subr.mxu0 0.0
        %1345 = vmatpush2.msra.mxu0 %v1243
        %1346 = vmatprep.subr.mxu0 0.0
        %1347 = vmatpush2.msra.mxu0 %v1242
        %1348 = vmatprep.subr.mxu0 0.0
        %1349 = vmatpush2.msra.mxu0 %v1241
        %1350 = vmatprep.subr.mxu0 0.0
        %1351 = vmatpush2.msra.mxu0 %v1240
        %1352 = vmatprep.mubr.f32.mxu0 %v1215
        %1353 = vmatmul.mubr.f32.gmra.mxu0 %v1214
        %v1354 = vpop.f32.mrf.mxu0
        %v1355 = vadd.f32 0.0, %v1354
        %v1356 = vpop.f32.mrf.mxu0
        %1357 = vmatprep.mubr.f32.mxu0 %v1219
        %1358 = vmatmul.mubr.f32.gmra.mxu0 %v1218
        %v1359 = vpop.f32.mrf.mxu0
        %v1360 = vadd.f32 0.0, %v1359
        %v1361 = vpop.f32.mrf.mxu0
        %1362 = vdwg.mxu0
        %1363 = vmatprep.subr.mxu0 0.0
        %1364 = vmatpush1.msra.mxu0 %v1271
        %1365 = vmatprep.subr.mxu0 0.0
        %1366 = vmatpush1.msra.mxu0 %v1270
        %1367 = vmatprep.subr.mxu0 0.0
        %1368 = vmatpush1.msra.mxu0 %v1269
        %1369 = vmatprep.subr.mxu0 0.0
        %1370 = vmatpush1.msra.mxu0 %v1268
        %1371 = vmatprep.subr.mxu0 0.0
        %1372 = vmatpush1.msra.mxu0 %v1267
        %1373 = vmatprep.subr.mxu0 0.0
        %1374 = vmatpush1.msra.mxu0 %v1266
        %1375 = vmatprep.subr.mxu0 0.0
        %1376 = vmatpush1.msra.mxu0 %v1265
        %1377 = vmatprep.subr.mxu0 0.0
        %1378 = vmatpush1.msra.mxu0 %v1264
        %1379 = vmatprep.subr.mxu0 0.0
        %1380 = vmatpush1.msra.mxu0 %v1263
        %1381 = vmatprep.subr.mxu0 0.0
        %1382 = vmatpush1.msra.mxu0 %v1262
        %1383 = vmatprep.subr.mxu0 0.0
        %1384 = vmatpush1.msra.mxu0 %v1261
        %1385 = vmatprep.subr.mxu0 0.0
        %1386 = vmatpush1.msra.mxu0 %v1260
        %1387 = vmatprep.subr.mxu0 0.0
        %1388 = vmatpush1.msra.mxu0 %v1259
        %1389 = vmatprep.subr.mxu0 0.0
        %1390 = vmatpush1.msra.mxu0 %v1258
        %1391 = vmatprep.subr.mxu0 0.0
        %1392 = vmatpush1.msra.mxu0 %v1257
        %1393 = vmatprep.subr.mxu0 0.0
        %1394 = vmatpush1.msra.mxu0 %v1256
        %1395 = vmatprep.subr.mxu0 0.0
        %1396 = vmatpush2.msra.mxu0 %v1287
        %1397 = vmatprep.subr.mxu0 0.0
        %1398 = vmatpush2.msra.mxu0 %v1286
        %1399 = vmatprep.subr.mxu0 0.0
        %1400 = vmatpush2.msra.mxu0 %v1285
        %1401 = vmatprep.subr.mxu0 0.0
        %1402 = vmatpush2.msra.mxu0 %v1284
        %1403 = vmatprep.subr.mxu0 0.0
        %1404 = vmatpush2.msra.mxu0 %v1283
        %1405 = vmatprep.subr.mxu0 0.0
        %1406 = vmatpush2.msra.mxu0 %v1282
        %1407 = vmatprep.subr.mxu0 0.0
        %1408 = vmatpush2.msra.mxu0 %v1281
        %1409 = vmatprep.subr.mxu0 0.0
        %1410 = vmatpush2.msra.mxu0 %v1280
        %1411 = vmatprep.subr.mxu0 0.0
        %1412 = vmatpush2.msra.mxu0 %v1279
        %1413 = vmatprep.subr.mxu0 0.0
        %1414 = vmatpush2.msra.mxu0 %v1278
        %1415 = vmatprep.subr.mxu0 0.0
        %1416 = vmatpush2.msra.mxu0 %v1277
        %1417 = vmatprep.subr.mxu0 0.0
        %1418 = vmatpush2.msra.mxu0 %v1276
        %1419 = vmatprep.subr.mxu0 0.0
        %1420 = vmatpush2.msra.mxu0 %v1275
        %1421 = vmatprep.subr.mxu0 0.0
        %1422 = vmatpush2.msra.mxu0 %v1274
        %1423 = vmatprep.subr.mxu0 0.0
        %1424 = vmatpush2.msra.mxu0 %v1273
        %1425 = vmatprep.subr.mxu0 0.0
        %1426 = vmatpush2.msra.mxu0 %v1272
        %1427 = vmatprep.mubr.f32.mxu0 %v1217
        %1428 = vmatmul.mubr.f32.gmra.mxu0 %v1216
        %v1429 = vpop.f32.mrf.mxu0
        %v1430 = vadd.f32 %v1355, %v1429
        %v1431 = vpop.f32.mrf.mxu0
        %1432 = vmatprep.mubr.f32.mxu0 %v1221
        %1433 = vmatmul.mubr.f32.gmra.mxu0 %v1220
        %v1434 = vpop.f32.mrf.mxu0
        %v1435 = vadd.f32 %v1360, %v1434
        %v1436 = vpop.f32.mrf.mxu0
        %1437 = vdwg.mxu0
        %v1438 = vadd.f32 %v1222, %v1430
        %v1439 = vadd.f32 %v1223, %v1435
        %vm1440 = vcmask 64512
        %1441 = vst.msk [vmem:[#allocation2] sm:$0xff] %vm1440, %v1438
        %1442 = vst.msk [vmem:[#allocation2 + $0x8] sm:$0xff] %vm1440, %v1439
        %p1443 = scmp.eq.s32.totalorder %s26, 3
        // Predicated region
        $region45: #{tpu_custom_call.1} parent=31 // pred_check
          %p1444 = pneg %p1443
        $region46: #{tpu_custom_call.1} parent=31 // pred_check_branch
          %1446 = sbr.rel (%p1444) target = $region48
        $region47: #{tpu_custom_call.1} parent=31 // pred_region
          %v1447 = vld [vmem:[#allocation2] sm:$0xff]
          %v1448 = vld [vmem:[#allocation2 + $0x8] sm:$0xff]
          %v1449 = vadd.f32 %v1447, %v1448
          %v1450 = vand.u32 2147483647, %v1449
          %v1451 = vadd.f32 %v1450, 1e-12
          %v1452 = vlog2.pop %v1451
          %v1453 = vmul.f32 %v1452, 0.6931472
          %vm1454 = vweird.f32 %v1453
          %vm1455 = vmxor %vm1454, 1
          %v1456 = vsel %vm1455, %v1453, 0.0
          %1457 = vst.msk [vmem:[%s235] sm:$0xff] %vm1440, %v1456
        $region48: #{tpu_custom_call.1} parent=31 // pred_fallthru
          _
        %s1458 = sand.u32 %s116, 1
        %s1459 = scalar_lea.sflag [#allocation5], %s1458
        %s1460 = sand.u32 %s116, 1
        %s1461 = smul.addr %s1460, 8
        %s1462 = scalar_lea.vmem [#allocation8], %s1461
        // Predicated region
        $region49: #{tpu_custom_call.1} parent=31 // pred_check
          %p1463 = pneg %p126
        $region50: #{tpu_custom_call.1} parent=31 // pred_check_branch
          %1465 = sbr.rel (%p1463) target = $region52
        $region51: #{tpu_custom_call.1} parent=31 // pred_region
          %s1467 = ssub.s32 128, 128
          %1468 = vsyncadd %s1459, %s1467
          %s1469 = smul.addr %s25, 128
          %s1470 = scalar_lea.hbm %s3, %s1469
          %s1472 = sshll.u32 %s1462, 4
          %s1473 = int_to_ptr.vmem [resolvable:$true] %s1472
          %1475 = dma.vmem_to_hbm [thread:$0]  %s1473, 128, %s1470, %s1459
        $region52: #{tpu_custom_call.1} parent=31 // pred_fallthru
          _
      $region32: #{tpu_custom_call.1} parent=5 // pred_fallthru
        _
      %p1476 = scmp.le.s32.totalorder 2, %s16
      // Predicated region
      $region53: #{tpu_custom_call.1} parent=5 // pred_check
        %p1477 = pneg %p1476
      $region54: #{tpu_custom_call.1} parent=5 // pred_check_branch
        %1479 = sbr.rel (%p1477) target = $region56
      $region55: #{tpu_custom_call.1} parent=5 // pred_region
        %s1480 = ssub.s32 %s16, 2
        // Predicated region
        $region57: #{tpu_custom_call.1} parent=55 // pred_check
          %p1481 = pneg %p132
        $region58: #{tpu_custom_call.1} parent=55 // pred_check_branch
          %1483 = sbr.rel (%p1481) target = $region60
        $region59: #{tpu_custom_call.1} parent=55 // pred_region
          %s1484 = sand.u32 %s117, 1
          %s1485 = scalar_lea.sflag [#allocation5], %s1484
          %s1486 = sand.u32 %s117, 1
          %s1487 = smul.addr %s1486, 8
          %s1488 = scalar_lea.vmem [#allocation8], %s1487
          %1489 = dma.done %s1485, 128
        $region60: #{tpu_custom_call.1} parent=55 // pred_fallthru
          _
      $region56: #{tpu_custom_call.1} parent=5 // pred_fallthru
        _
    $region6: #{tpu_custom_call.1} parent=1 // loop_footer
      %s20 = sadd.s32 1, %s16
    $region7: #{tpu_custom_call.1} parent=1 // loop_footer_branch
      %15 = sbr.rel target = $region3
    $region8: #{tpu_custom_call.1} parent=1 // loop_exit
      _
    %1490 = vsyncpa [#allocation4], 1
    %s1491 = scalar_lea.sflag [#allocation4], 1
    %1492 = vsyncpa %s1491, 1
    %1493 = vsyncpa [#allocation7], 1
    %1494 = vsyncpa [#allocation5], 1
    %s1495 = scalar_lea.sflag [#allocation5], 1
    %1496 = vsyncpa %s1495, 1

</llo_original>
